<compile_context>
chip_gen: v5e
topology: v5e:2x2
jax: 0.10.0
libtpu: 0.0.40
codegen_flags: <defaults>
</compile_context>

<pallas_src>
import functools

import jax
import jax.numpy as jnp
from jax import lax
from jax.experimental import pallas as pl
from jax.experimental.pallas import tpu as pltpu


_VMEM_LIMIT = 48 * 1024 * 1024   # > 32 MiB scoped default, < v7x 64 MiB physical


def _k_tile(dim, target=1024):
    """Largest 128-aligned divisor of `dim` <= target (contraction dims must be
    covered exactly); falls back to the full dim if no aligned divisor exists."""
    if dim <= target:
        return dim
    t = (target // 128) * 128
    while t >= 128:
        if dim % t == 0:
            return t
        t -= 128
    return dim


# ---------------------------------------------------------------------------
# K-tiled Linear kernel:  y = x @ W + b   (W already laid out (in, out))
# ---------------------------------------------------------------------------
def _linear_kernel(x_ref, w_ref, b_ref, o_ref, acc_ref):
    kk = pl.program_id(2)

    @pl.when(kk == 0)
    def _init():
        acc_ref[...] = jnp.zeros_like(acc_ref)

    acc_ref[...] += jnp.dot(x_ref[...], w_ref[...],
                            preferred_element_type=jnp.float32)

    @pl.when(kk == pl.num_programs(2) - 1)
    def _finalize():
        o_ref[...] = (acc_ref[...] + b_ref[...].astype(jnp.float32)
                      ).astype(o_ref.dtype)


def _linear(x, w_t, b_row, *, out_dtype=None):
    """x: (M, Din); w_t: (Din, Dout); b_row: (1, Dout)  ->  (M, Dout)."""
    M, Din = x.shape
    Dout = w_t.shape[1]
    if out_dtype is None:
        out_dtype = x.dtype

    tm = M if M <= 512 else 512            # 512-row tiles: ~85% of HBM roofline
    tn = Dout if Dout <= 512 else 512      # 128-aligned; tails masked by cdiv grid
    tk = _k_tile(Din)                      # must divide Din exactly (contraction)

    flops = 2 * M * Din * Dout
    bytes_accessed = (
        x.size * jnp.dtype(x.dtype).itemsize
        + w_t.size * jnp.dtype(w_t.dtype).itemsize
        + b_row.size * jnp.dtype(b_row.dtype).itemsize
        + M * Dout * jnp.dtype(out_dtype).itemsize)

    return pl.pallas_call(
        _linear_kernel,
        out_shape=jax.ShapeDtypeStruct((M, Dout), out_dtype),
        grid_spec=pltpu.PrefetchScalarGridSpec(
            num_scalar_prefetch=0,
            grid=(pl.cdiv(M, tm), pl.cdiv(Dout, tn), Din // tk),
            in_specs=[
                pl.BlockSpec((tm, tk), lambda i, j, kk: (i, kk)),
                pl.BlockSpec((tk, tn), lambda i, j, kk: (kk, j)),
                pl.BlockSpec((1, tn), lambda i, j, kk: (0, j)),
            ],
            out_specs=pl.BlockSpec((tm, tn), lambda i, j, kk: (i, j)),
            scratch_shapes=[pltpu.VMEM((tm, tn), jnp.float32)],
        ),
        compiler_params=pltpu.CompilerParams(
            dimension_semantics=("parallel", "parallel", "arbitrary"),
            vmem_limit_bytes=_VMEM_LIMIT),
        cost_estimate=pl.CostEstimate(flops=flops, transcendentals=0,
                                      bytes_accessed=bytes_accessed),
    )(x, w_t, b_row)


# ---------------------------------------------------------------------------
# Flash-attention core: softmax(q k^T) v with an online softmax over kv tiles.
# q arrives pre-scaled (1/sqrt(d_k) folded into Wq).  Block refs are squeezed
# to (tile, d_k) so the same body serves both the (B,H,S,d_k) layout and the
# transpose-free (B,S,D) head-in-last-dim layout.
# ---------------------------------------------------------------------------
def _flash_attn_kernel(q_ref, k_ref, v_ref, o_ref, m_sc, l_sc, acc_sc,
                       *, kv_len, kv_tile):
    ki = pl.program_id(3)

    @pl.when(ki == 0)
    def _init():
        m_sc[...] = jnp.full(m_sc.shape, -jnp.inf, jnp.float32)
        l_sc[...] = jnp.zeros(l_sc.shape, jnp.float32)
        acc_sc[...] = jnp.zeros(acc_sc.shape, jnp.float32)

    q = q_ref[...]                       # (tq, d_k), native (bf16) dtype
    k = k_ref[...]                       # (tk, d_k)
    v = v_ref[...]                       # (tk, d_k)

    # q @ k^T without materializing a transpose (contract on d_k of both).
    s = lax.dot_general(q, k, (((1,), (1,)), ((), ())),
                        preferred_element_type=jnp.float32)     # (tq, tk)

    # Masked kv tail (only generated when Sk is not a multiple of the kv tile).
    if kv_len % kv_tile != 0:
        col = ki * kv_tile + lax.broadcasted_iota(jnp.int32, s.shape, 1)
        s = jnp.where(col < kv_len, s, -1e30)

    # TODO(synk): the optional `mask` argument of the PyTorch forward is not
    # implemented (only the mask=None path is reproduced).

    m_prev = m_sc[...]
    m_new = jnp.maximum(m_prev, jnp.max(s, axis=-1, keepdims=True))
    alpha = jnp.exp(m_prev - m_new)
    p = jnp.exp(s - m_new)               # f32 exp (accuracy; EUP slot)

    l_sc[...] = alpha * l_sc[...] + jnp.sum(p, axis=-1, keepdims=True)
    acc_sc[...] = alpha * acc_sc[...] + jnp.dot(
        p.astype(v.dtype), v, preferred_element_type=jnp.float32)
    m_sc[...] = m_new

    @pl.when(ki == pl.num_programs(3) - 1)
    def _finalize():
        inv_l = pl.reciprocal(l_sc[...], approx=True)   # EUP, not a VPU divide
        o_ref[...] = (acc_sc[...] * inv_l).astype(o_ref.dtype)


def _flash_attention(q, k, v, *, num_heads, heads_in_last_dim):
    if heads_in_last_dim:
        B, Sq, D = q.shape
        Sk = k.shape[1]
        d_k = D // num_heads
    else:
        B, _, Sq, d_k = q.shape
        Sk = k.shape[2]
    H = num_heads

    # Tile targets: tq up to 256 (fills the 256-wide v6e/v7x MXU rows, halves
    # grid-step count); tk = 128 keeps the f32 score tile at <= 32 vregs.
    tq = Sq if Sq <= 256 else 256
    tk = Sk if Sk <= 128 else 128

    kernel = functools.partial(_flash_attn_kernel, kv_len=Sk, kv_tile=tk)

    if heads_in_last_dim:
        # Heads addressed via the last-dim block index: no HBM split/merge and
        # lane-dense (128-multiple) output stores straight into (B, Sq, D).
        q_spec = pl.BlockSpec((None, tq, d_k), lambda b, h, qi, ki: (b, qi, h))
        kv_spec = pl.BlockSpec((None, tk, d_k), lambda b, h, qi, ki: (b, ki, h))
        out_shape = jax.ShapeDtypeStruct((B, Sq, H * d_k), q.dtype)
    else:
        q_spec = pl.BlockSpec((None, None, tq, d_k),
                              lambda b, h, qi, ki: (b, h, qi, 0))
        kv_spec = pl.BlockSpec((None, None, tk, d_k),
                               lambda b, h, qi, ki: (b, h, ki, 0))
        out_shape = jax.ShapeDtypeStruct((B, H, Sq, d_k), q.dtype)

    itemsize = jnp.dtype(q.dtype).itemsize
    cost = pl.CostEstimate(
        flops=4 * B * H * Sq * Sk * d_k,
        transcendentals=B * H * Sq * Sk,
        bytes_accessed=itemsize * (q.size + k.size + v.size + B * H * Sq * d_k))

    return pl.pallas_call(
        kernel,
        out_shape=out_shape,
        grid_spec=pltpu.PrefetchScalarGridSpec(
            num_scalar_prefetch=0,
            grid=(B, H, pl.cdiv(Sq, tq), pl.cdiv(Sk, tk)),
            in_specs=[q_spec, kv_spec, kv_spec],
            out_specs=q_spec,
            scratch_shapes=[
                pltpu.VMEM((tq, 1), jnp.float32),     # running max  m
                pltpu.VMEM((tq, 1), jnp.float32),     # running sum  l
                pltpu.VMEM((tq, d_k), jnp.float32),   # unnormalized accumulator
            ],
        ),
        compiler_params=pltpu.CompilerParams(
            dimension_semantics=("parallel", "parallel", "parallel", "arbitrary"),
            vmem_limit_bytes=_VMEM_LIMIT),
        cost_estimate=cost,
    )(q, k, v)


# ---------------------------------------------------------------------------
# Full module forward.
# ---------------------------------------------------------------------------
def multi_head_attention(q, k, v, params, *, num_heads,
                         compute_dtype=jnp.bfloat16):
    """q, k, v: (B, S, d_model).  params: PyTorch-style Linear weights (out, in).

    The QKV-fusion check (`q is k is v`) must happen outside jit (inside a jit
    trace all three args get distinct tracers), so this thin wrapper dispatches
    into a jitted impl with a static flag.
    """
    fused_qkv = (q is k) and (k is v)
    return _mha_impl(q, k, v, params, num_heads=num_heads,
                     fused_qkv=fused_qkv, compute_dtype=compute_dtype)


@functools.partial(jax.jit,
                   static_argnames=("num_heads", "fused_qkv", "compute_dtype"))
def _mha_impl(q, k, v, params, *, num_heads, fused_qkv, compute_dtype):
    B, Sq, D = q.shape
    Sk = k.shape[1]
    Sv = v.shape[1]
    assert D % num_heads == 0
    d_k = D // num_heads
    scale = 1.0 / (d_k ** 0.5)
    out_dtype = q.dtype
    cdt = compute_dtype

    # One-time HBM layout prep (plain XLA): transpose PyTorch (out, in) weights
    # to (in, out), cast to the MXU-native compute dtype (bf16 by default), and
    # fold the 1/sqrt(d_k) scale into Wq / bq.
    wq_t = (params['Wq'] * scale).T.astype(cdt)
    bq_r = (params['bq'] * scale).reshape(1, D).astype(cdt)
    wk_t = params['Wk'].T.astype(cdt)
    bk_r = params['bk'].reshape(1, D).astype(cdt)
    wv_t = params['Wv'].T.astype(cdt)
    bv_r = params['bv'].reshape(1, D).astype(cdt)
    wo_t = params['Wo'].T.astype(cdt)
    bo_r = params['bo'].reshape(1, D).astype(cdt)

    if fused_qkv:
        # Self-attention: single (D, 3D) GEMM reads the activations from HBM
        # once and gives the MXU 3x wider N per grid step.
        w_qkv = jnp.concatenate([wq_t, wk_t, wv_t], axis=1)
        b_qkv = jnp.concatenate([bq_r, bk_r, bv_r], axis=1)
        qkv = _linear(q.reshape(B * Sq, D).astype(cdt), w_qkv, b_qkv,
                      out_dtype=cdt)
        q_proj = qkv[:, 0:D]
        k_proj = qkv[:, D:2 * D]
        v_proj = qkv[:, 2 * D:3 * D]
        Sk = Sv = Sq
    else:
        q_proj = _linear(q.reshape(B * Sq, D).astype(cdt), wq_t, bq_r,
                         out_dtype=cdt)
        k_proj = _linear(k.reshape(B * Sk, D).astype(cdt), wk_t, bk_r,
                         out_dtype=cdt)
        v_proj = _linear(v.reshape(B * Sv, D).astype(cdt), wv_t, bv_r,
                         out_dtype=cdt)

    heads_in_last_dim = (d_k % 128 == 0)
    if heads_in_last_dim:
        # Transpose-free path: heads stay packed along the last dim; attention
        # output lands directly as (B, Sq, D) with lane-dense stores.
        attn = _flash_attention(q_proj.reshape(B, Sq, D),
                                k_proj.reshape(B, Sk, D),
                                v_proj.reshape(B, Sv, D),
                                num_heads=num_heads, heads_in_last_dim=True)
        concat = attn.reshape(B * Sq, D)
    else:
        # d_k < 128: a head-sized last-dim block would violate the (8,128)
        # tiling rule, so split heads once in HBM (plain XLA) instead.
        qh = q_proj.reshape(B, Sq, num_heads, d_k).transpose(0, 2, 1, 3)
        kh = k_proj.reshape(B, Sk, num_heads, d_k).transpose(0, 2, 1, 3)
        vh = v_proj.reshape(B, Sv, num_heads, d_k).transpose(0, 2, 1, 3)
        attn = _flash_attention(qh, kh, vh, num_heads=num_heads,
                                heads_in_last_dim=False)       # (B, H, Sq, d_k)
        concat = attn.transpose(0, 2, 1, 3).reshape(B * Sq, D)

    out = _linear(concat.astype(cdt), wo_t, bo_r, out_dtype=out_dtype)
    return out.reshape(B, Sq, D)


# ---------------------------------------------------------------------------
# Pure-JAX f32 reference mirroring the PyTorch forward (mask=None path).
# ---------------------------------------------------------------------------
def _reference(q, k, v, params, num_heads):
    B, Sq, D = q.shape
    d_k = D // num_heads

    def lin(x, w, b):
        return x @ w.T + b

    qp = lin(q, params['Wq'], params['bq']).reshape(B, Sq, num_heads, d_k)
    kp = lin(k, params['Wk'], params['bk']).reshape(B, -1, num_heads, d_k)
    vp = lin(v, params['Wv'], params['bv']).reshape(B, -1, num_heads, d_k)
    qp = jnp.transpose(qp, (0, 2, 1, 3))
    kp = jnp.transpose(kp, (0, 2, 1, 3))
    vp = jnp.transpose(vp, (0, 2, 1, 3))
    scores = jnp.einsum('bhqd,bhkd->bhqk', qp, kp) / (d_k ** 0.5)
    probs = jax.nn.softmax(scores, axis=-1)
    attn = jnp.einsum('bhqk,bhkd->bhqd', probs, vp)
    concat = jnp.transpose(attn, (0, 2, 1, 3)).reshape(B, Sq, D)
    return lin(concat, params['Wo'], params['bo'])


if __name__ == "__main__":
    # Small, module-consistent shapes.
    batch, seq, d_model, num_heads = 2, 8, 32, 4

    key = jax.random.PRNGKey(0)
    kq, kk, kv, k1, k2, k3, k4, k5, k6, k7, k8 = jax.random.split(key, 11)

    q = jax.random.normal(kq, (batch, seq, d_model), dtype=jnp.float32)
    k = jax.random.normal(kk, (batch, seq, d_model), dtype=jnp.float32)
    v = jax.random.normal(kv, (batch, seq, d_model), dtype=jnp.float32)

    # Deterministic parameter init (PyTorch nn.Linear layout: (out, in) weights).
    scale = 1.0 / (d_model ** 0.5)
    params = {
        'Wq': jax.random.uniform(k1, (d_model, d_model), jnp.float32, -scale, scale),
        'bq': jax.random.uniform(k2, (d_model,), jnp.float32, -scale, scale),
        'Wk': jax.random.uniform(k3, (d_model, d_model), jnp.float32, -scale, scale),
        'bk': jax.random.uniform(k4, (d_model,), jnp.float32, -scale, scale),
        'Wv': jax.random.uniform(k5, (d_model, d_model), jnp.float32, -scale, scale),
        'bv': jax.random.uniform(k6, (d_model,), jnp.float32, -scale, scale),
        'Wo': jax.random.uniform(k7, (d_model, d_model), jnp.float32, -scale, scale),
        'bo': jax.random.uniform(k8, (d_model,), jnp.float32, -scale, scale),
    }

    # --- Cross-attention (distinct q/k/v): separate-projection path ---------
    ref_cross = _reference(q, k, v, params, num_heads)

    # bf16 MXU operands (production default) vs f32 reference: loose tolerance.
    out_bf16 = jax.block_until_ready(
        multi_head_attention(q, k, v, params, num_heads=num_heads))
    assert out_bf16.shape == (batch, seq, d_model)
    assert jnp.allclose(out_bf16, ref_cross, atol=8e-2, rtol=8e-2), \
        "bf16 cross-attention mismatch vs reference"

    # f32 compute path validates the kernel math tightly (only the online
    # softmax + approximate EUP reciprocal differ from the reference).
    out_f32 = jax.block_until_ready(
        multi_head_attention(q, k, v, params, num_heads=num_heads,
                             compute_dtype=jnp.float32))
    assert jnp.allclose(out_f32, ref_cross, atol=2e-3, rtol=2e-3), \
        "f32 cross-attention mismatch vs reference"

    # --- Self-attention (q is k is v): fused-QKV single-GEMM path -----------
    ref_self = _reference(q, q, q, params, num_heads)

    out_self_bf16 = jax.block_until_ready(
        multi_head_attention(q, q, q, params, num_heads=num_heads))
    assert jnp.allclose(out_self_bf16, ref_self, atol=8e-2, rtol=8e-2), \
        "bf16 self-attention (fused QKV) mismatch vs reference"

    out_self_f32 = jax.block_until_ready(
        multi_head_attention(q, q, q, params, num_heads=num_heads,
                             compute_dtype=jnp.float32))
    assert jnp.allclose(out_self_f32, ref_self, atol=2e-3, rtol=2e-3), \
        "f32 self-attention (fused QKV) mismatch vs reference"

    print("KERNEL_OK")
</pallas_src>

<mosaic_0001>
module attributes {stable_mosaic.version = 11 : i64} {
  func.func @_linear_kernel(%arg0: i32, %arg1: i32, %arg2: i32, %arg3: memref<16x32xbf16, #tpu.memory_space<vmem>>, %arg4: memref<32x32xbf16, #tpu.memory_space<vmem>>, %arg5: memref<1x32xbf16, #tpu.memory_space<vmem>>, %arg6: memref<16x32xbf16, #tpu.memory_space<vmem>>, %arg7: memref<16x32xf32, #tpu.memory_space<vmem>>) attributes {dimension_semantics = [#tpu.dimension_semantics<parallel>, #tpu.dimension_semantics<parallel>, #tpu.dimension_semantics<arbitrary>], iteration_bounds = array<i64: 1, 1, 1>, scalar_prefetch = 0 : i64, scratch_operands = 1 : i64, tpu.core_type = #tpu.core_type<tc>, window_params = [{transform_indices = @transform_0, window_bounds = array<i64: 16, 32>}, {transform_indices = @transform_1, window_bounds = array<i64: 32, 32>}, {transform_indices = @transform_2, window_bounds = array<i64: 1, 32>}, {transform_indices = @transform_3, window_bounds = array<i64: 16, 32>}]} {
    %c0_i32 = arith.constant 0 : i32
    %0 = arith.cmpi eq, %arg2, %c0_i32 : i32
    %1 = arith.extui %0 : i1 to i32
    %c0_i32_0 = arith.constant 0 : i32
    %2 = arith.cmpi ne, %1, %c0_i32_0 : i32
    scf.if %2 {
      %cst_10 = arith.constant 0.000000e+00 : f32
      %12 = vector.broadcast %cst_10 : f32 to vector<16x32xf32>
      %c0_11 = arith.constant 0 : index
      %c0_12 = arith.constant 0 : index
      %13 = vector.load %arg7[%c0_11, %c0_12] : memref<16x32xf32, #tpu.memory_space<vmem>>, vector<16x32xf32>
      tpu.vector_store %arg7[%c0_11, %c0_12], %12 {strides = array<i32>} : memref<16x32xf32, #tpu.memory_space<vmem>>, vector<16x32xf32>,
    } else {
    }
    %c0 = arith.constant 0 : index
    %c0_1 = arith.constant 0 : index
    %3 = vector.load %arg7[%c0, %c0_1] : memref<16x32xf32, #tpu.memory_space<vmem>>, vector<16x32xf32>
    %c0_2 = arith.constant 0 : index
    %c0_3 = arith.constant 0 : index
    %4 = vector.load %arg3[%c0_2, %c0_3] : memref<16x32xbf16, #tpu.memory_space<vmem>>, vector<16x32xbf16>
    %c0_4 = arith.constant 0 : index
    %c0_5 = arith.constant 0 : index
    %5 = vector.load %arg4[%c0_4, %c0_5] : memref<32x32xbf16, #tpu.memory_space<vmem>>, vector<32x32xbf16>
    %cst = arith.constant dense<0.000000e+00> : vector<16x32xf32>
    %6 = tpu.matmul %4, %5, %cst {dimension_numbers = #tpu.dot_dimension_numbers<[1], [0], [0], [1], [0, 0, 1, 1], [], []>} : vector<16x32xbf16>, vector<32x32xbf16>, vector<16x32xf32> -> vector<16x32xf32>
    %7 = arith.addf %3, %6 : vector<16x32xf32>
    %c0_6 = arith.constant 0 : index
    %c0_7 = arith.constant 0 : index
    %8 = vector.load %arg7[%c0_6, %c0_7] : memref<16x32xf32, #tpu.memory_space<vmem>>, vector<16x32xf32>
    tpu.vector_store %arg7[%c0_6, %c0_7], %7 {strides = array<i32>} : memref<16x32xf32, #tpu.memory_space<vmem>>, vector<16x32xf32>,
    %c0_i32_8 = arith.constant 0 : i32
    %9 = arith.cmpi eq, %arg2, %c0_i32_8 : i32
    %10 = arith.extui %9 : i1 to i32
    %c0_i32_9 = arith.constant 0 : i32
    %11 = arith.cmpi ne, %10, %c0_i32_9 : i32
    scf.if %11 {
      %c0_10 = arith.constant 0 : index
      %c0_11 = arith.constant 0 : index
      %12 = vector.load %arg7[%c0_10, %c0_11] : memref<16x32xf32, #tpu.memory_space<vmem>>, vector<16x32xf32>
      %c0_12 = arith.constant 0 : index
      %c0_13 = arith.constant 0 : index
      %13 = vector.load %arg5[%c0_12, %c0_13] : memref<1x32xbf16, #tpu.memory_space<vmem>>, vector<1x32xbf16>
      %14 = arith.extf %13 : vector<1x32xbf16> to vector<1x32xf32>
      %15 = vector.broadcast %14 : vector<1x32xf32> to vector<16x32xf32>
      %16 = arith.addf %12, %15 : vector<16x32xf32>
      %17 = arith.truncf %16 : vector<16x32xf32> to vector<16x32xbf16>
      %c0_14 = arith.constant 0 : index
      %c0_15 = arith.constant 0 : index
      %18 = vector.load %arg6[%c0_14, %c0_15] : memref<16x32xbf16, #tpu.memory_space<vmem>>, vector<16x32xbf16>
      tpu.vector_store %arg6[%c0_14, %c0_15], %17 {strides = array<i32>} : memref<16x32xbf16, #tpu.memory_space<vmem>>, vector<16x32xbf16>,
    } else {
    }
    return
  }
  func.func @transform_0(%arg0: i32, %arg1: i32, %arg2: i32) -> (i32, i32) {
    %c0_i32 = arith.constant 0 : i32
    return %arg0, %arg2 : i32, i32
  }
  func.func @transform_1(%arg0: i32, %arg1: i32, %arg2: i32) -> (i32, i32) {
    %c0_i32 = arith.constant 0 : i32
    return %arg2, %arg1 : i32, i32
  }
  func.func @transform_2(%arg0: i32, %arg1: i32, %arg2: i32) -> (i32, i32) {
    %c0_i32 = arith.constant 0 : i32
    %c0_i32_0 = arith.constant 0 : i32
    return %c0_i32, %arg1 : i32, i32
  }
  func.func @transform_3(%arg0: i32, %arg1: i32, %arg2: i32) -> (i32, i32) {
    %c0_i32 = arith.constant 0 : i32
    return %arg0, %arg1 : i32, i32
  }
}

module attributes {stable_mosaic.version = 11 : i64} {
  func.func @_flash_attn_kernel(%arg0: i32, %arg1: i32, %arg2: i32, %arg3: i32, %arg4: memref<1x1x8x8xbf16, #tpu.memory_space<vmem>>, %arg5: memref<1x1x8x8xbf16, #tpu.memory_space<vmem>>, %arg6: memref<1x1x8x8xbf16, #tpu.memory_space<vmem>>, %arg7: memref<1x1x8x8xbf16, #tpu.memory_space<vmem>>, %arg8: memref<8x1xf32, #tpu.memory_space<vmem>>, %arg9: memref<8x1xf32, #tpu.memory_space<vmem>>, %arg10: memref<8x8xf32, #tpu.memory_space<vmem>>) attributes {dimension_semantics = [#tpu.dimension_semantics<parallel>, #tpu.dimension_semantics<parallel>, #tpu.dimension_semantics<parallel>, #tpu.dimension_semantics<arbitrary>], iteration_bounds = array<i64: 2, 4, 1, 1>, scalar_prefetch = 0 : i64, scratch_operands = 3 : i64, tpu.core_type = #tpu.core_type<tc>, window_params = [{transform_indices = @transform_0, window_bounds = array<i64: 1, 1, 8, 8>}, {transform_indices = @transform_1, window_bounds = array<i64: 1, 1, 8, 8>}, {transform_indices = @transform_2, window_bounds = array<i64: 1, 1, 8, 8>}, {transform_indices = @transform_3, window_bounds = array<i64: 1, 1, 8, 8>}]} {
    %c0_i32 = arith.constant 0 : i32
    %0 = arith.cmpi eq, %arg3, %c0_i32 : i32
    %1 = arith.extui %0 : i1 to i32
    %c0_i32_0 = arith.constant 0 : i32
    %2 = arith.cmpi ne, %1, %c0_i32_0 : i32
    scf.if %2 {
      %cst_29 = arith.constant 0xFF800000 : f32
      %36 = vector.broadcast %cst_29 : f32 to vector<8x1xf32>
      %c0_30 = arith.constant 0 : index
      %c0_31 = arith.constant 0 : index
      %37 = vector.load %arg8[%c0_30, %c0_31] : memref<8x1xf32, #tpu.memory_space<vmem>>, vector<8x1xf32>
      tpu.vector_store %arg8[%c0_30, %c0_31], %36 {strides = array<i32>} : memref<8x1xf32, #tpu.memory_space<vmem>>, vector<8x1xf32>,
      %cst_32 = arith.constant 0.000000e+00 : f32
      %38 = vector.broadcast %cst_32 : f32 to vector<8x1xf32>
      %c0_33 = arith.constant 0 : index
      %c0_34 = arith.constant 0 : index
      %39 = vector.load %arg9[%c0_33, %c0_34] : memref<8x1xf32, #tpu.memory_space<vmem>>, vector<8x1xf32>
      tpu.vector_store %arg9[%c0_33, %c0_34], %38 {strides = array<i32>} : memref<8x1xf32, #tpu.memory_space<vmem>>, vector<8x1xf32>,
      %cst_35 = arith.constant 0.000000e+00 : f32
      %40 = vector.broadcast %cst_35 : f32 to vector<8x8xf32>
      %c0_36 = arith.constant 0 : index
      %c0_37 = arith.constant 0 : index
      %41 = vector.load %arg10[%c0_36, %c0_37] : memref<8x8xf32, #tpu.memory_space<vmem>>, vector<8x8xf32>
      tpu.vector_store %arg10[%c0_36, %c0_37], %40 {strides = array<i32>} : memref<8x8xf32, #tpu.memory_space<vmem>>, vector<8x8xf32>,
    } else {
    }
    %c0 = arith.constant 0 : index
    %c0_1 = arith.constant 0 : index
    %c0_2 = arith.constant 0 : index
    %c0_3 = arith.constant 0 : index
    %3 = vector.load %arg4[%c0, %c0_1, %c0_2, %c0_3] : memref<1x1x8x8xbf16, #tpu.memory_space<vmem>>, vector<1x1x8x8xbf16>
    %4 = vector.shape_cast %3 : vector<1x1x8x8xbf16> to vector<8x8xbf16>
    %c0_4 = arith.constant 0 : index
    %c0_5 = arith.constant 0 : index
    %c0_6 = arith.constant 0 : index
    %c0_7 = arith.constant 0 : index
    %5 = vector.load %arg5[%c0_4, %c0_5, %c0_6, %c0_7] : memref<1x1x8x8xbf16, #tpu.memory_space<vmem>>, vector<1x1x8x8xbf16>
    %6 = vector.shape_cast %5 : vector<1x1x8x8xbf16> to vector<8x8xbf16>
    %c0_8 = arith.constant 0 : index
    %c0_9 = arith.constant 0 : index
    %c0_10 = arith.constant 0 : index
    %c0_11 = arith.constant 0 : index
    %7 = vector.load %arg6[%c0_8, %c0_9, %c0_10, %c0_11] : memref<1x1x8x8xbf16, #tpu.memory_space<vmem>>, vector<1x1x8x8xbf16>
    %8 = vector.shape_cast %7 : vector<1x1x8x8xbf16> to vector<8x8xbf16>
    %cst = arith.constant dense<0.000000e+00> : vector<8x8xf32>
    %9 = tpu.matmul %4, %6, %cst {dimension_numbers = #tpu.dot_dimension_numbers<[1], [1], [0], [0], [0, 0, 1, 0], [], []>} : vector<8x8xbf16>, vector<8x8xbf16>, vector<8x8xf32> -> vector<8x8xf32>
    %c0_12 = arith.constant 0 : index
    %c0_13 = arith.constant 0 : index
    %10 = vector.load %arg8[%c0_12, %c0_13] : memref<8x1xf32, #tpu.memory_space<vmem>>, vector<8x1xf32>
    %cst_14 = arith.constant dense<0xFF800000> : vector<8xf32>
    %11 = vector.multi_reduction <maximumf>, %9, %cst_14 [1] : vector<8x8xf32> to vector<8xf32>
    %12 = vector.shape_cast %11 : vector<8xf32> to vector<8x1xf32>
    %13 = arith.maximumf %10, %12 : vector<8x1xf32>
    %14 = arith.subf %10, %13 : vector<8x1xf32>
    %15 = math.exp %14 : vector<8x1xf32>
    %16 = vector.broadcast %13 : vector<8x1xf32> to vector<8x8xf32>
    %17 = arith.subf %9, %16 : vector<8x8xf32>
    %18 = math.exp %17 : vector<8x8xf32>
    %c0_15 = arith.constant 0 : index
    %c0_16 = arith.constant 0 : index
    %19 = vector.load %arg9[%c0_15, %c0_16] : memref<8x1xf32, #tpu.memory_space<vmem>>, vector<8x1xf32>
    %20 = arith.mulf %15, %19 : vector<8x1xf32>
    %cst_17 = arith.constant dense<0.000000e+00> : vector<8xf32>
    %21 = vector.multi_reduction <add>, %18, %cst_17 [1] : vector<8x8xf32> to vector<8xf32>
    %22 = vector.shape_cast %21 : vector<8xf32> to vector<8x1xf32>
    %23 = arith.addf %20, %22 : vector<8x1xf32>
    %c0_18 = arith.constant 0 : index
    %c0_19 = arith.constant 0 : index
    %24 = vector.load %arg9[%c0_18, %c0_19] : memref<8x1xf32, #tpu.memory_space<vmem>>, vector<8x1xf32>
    tpu.vector_store %arg9[%c0_18, %c0_19], %23 {strides = array<i32>} : memref<8x1xf32, #tpu.memory_space<vmem>>, vector<8x1xf32>,
    %c0_20 = arith.constant 0 : index
    %c0_21 = arith.constant 0 : index
    %25 = vector.load %arg10[%c0_20, %c0_21] : memref<8x8xf32, #tpu.memory_space<vmem>>, vector<8x8xf32>
    %26 = vector.broadcast %15 : vector<8x1xf32> to vector<8x8xf32>
    %27 = arith.mulf %26, %25 : vector<8x8xf32>
    %28 = arith.truncf %18 : vector<8x8xf32> to vector<8x8xbf16>
    %cst_22 = arith.constant dense<0.000000e+00> : vector<8x8xf32>
    %29 = tpu.matmul %28, %8, %cst_22 {dimension_numbers = #tpu.dot_dimension_numbers<[1], [0], [0], [1], [0, 0, 1, 1], [], []>} : vector<8x8xbf16>, vector<8x8xbf16>, vector<8x8xf32> -> vector<8x8xf32>
    %30 = arith.addf %27, %29 : vector<8x8xf32>
    %c0_23 = arith.constant 0 : index
    %c0_24 = arith.constant 0 : index
    %31 = vector.load %arg10[%c0_23, %c0_24] : memref<8x8xf32, #tpu.memory_space<vmem>>, vector<8x8xf32>
    tpu.vector_store %arg10[%c0_23, %c0_24], %30 {strides = array<i32>} : memref<8x8xf32, #tpu.memory_space<vmem>>, vector<8x8xf32>,
    %c0_25 = arith.constant 0 : index
    %c0_26 = arith.constant 0 : index
    %32 = vector.load %arg8[%c0_25, %c0_26] : memref<8x1xf32, #tpu.memory_space<vmem>>, vector<8x1xf32>
    tpu.vector_store %arg8[%c0_25, %c0_26], %13 {strides = array<i32>} : memref<8x1xf32, #tpu.memory_space<vmem>>, vector<8x1xf32>,
    %c0_i32_27 = arith.constant 0 : i32
    %33 = arith.cmpi eq, %arg3, %c0_i32_27 : i32
    %34 = arith.extui %33 : i1 to i32
    %c0_i32_28 = arith.constant 0 : i32
    %35 = arith.cmpi ne, %34, %c0_i32_28 : i32
    scf.if %35 {
      %c0_29 = arith.constant 0 : index
      %c0_30 = arith.constant 0 : index
      %36 = vector.load %arg9[%c0_29, %c0_30] : memref<8x1xf32, #tpu.memory_space<vmem>>, vector<8x1xf32>
      %37 = tpu.reciprocal %36 {approx = true} : vector<8x1xf32> -> vector<8x1xf32>
      %c0_31 = arith.constant 0 : index
      %c0_32 = arith.constant 0 : index
      %38 = vector.load %arg10[%c0_31, %c0_32] : memref<8x8xf32, #tpu.memory_space<vmem>>, vector<8x8xf32>
      %39 = vector.broadcast %37 : vector<8x1xf32> to vector<8x8xf32>
      %40 = arith.mulf %38, %39 : vector<8x8xf32>
      %41 = arith.truncf %40 : vector<8x8xf32> to vector<8x8xbf16>
      %c0_33 = arith.constant 0 : index
      %c0_34 = arith.constant 0 : index
      %c0_35 = arith.constant 0 : index
      %c0_36 = arith.constant 0 : index
      %42 = vector.load %arg7[%c0_33, %c0_34, %c0_35, %c0_36] : memref<1x1x8x8xbf16, #tpu.memory_space<vmem>>, vector<1x1x8x8xbf16>
      %43 = vector.shape_cast %42 : vector<1x1x8x8xbf16> to vector<8x8xbf16>
      %44 = vector.shape_cast %41 : vector<8x8xbf16> to vector<1x1x8x8xbf16>
      tpu.vector_store %arg7[%c0_33, %c0_34, %c0_35, %c0_36], %44 {strides = array<i32>} : memref<1x1x8x8xbf16, #tpu.memory_space<vmem>>, vector<1x1x8x8xbf16>,
    } else {
    }
    return
  }
  func.func @transform_0(%arg0: i32, %arg1: i32, %arg2: i32, %arg3: i32) -> (i32, i32, i32, i32) {
    %c0_i32 = arith.constant 0 : i32
    %c0_i32_0 = arith.constant 0 : i32
    return %arg0, %arg1, %arg2, %c0_i32 : i32, i32, i32, i32
  }
  func.func @transform_1(%arg0: i32, %arg1: i32, %arg2: i32, %arg3: i32) -> (i32, i32, i32, i32) {
    %c0_i32 = arith.constant 0 : i32
    %c0_i32_0 = arith.constant 0 : i32
    return %arg0, %arg1, %arg3, %c0_i32 : i32, i32, i32, i32
  }
  func.func @transform_2(%arg0: i32, %arg1: i32, %arg2: i32, %arg3: i32) -> (i32, i32, i32, i32) {
    %c0_i32 = arith.constant 0 : i32
    %c0_i32_0 = arith.constant 0 : i32
    return %arg0, %arg1, %arg3, %c0_i32 : i32, i32, i32, i32
  }
  func.func @transform_3(%arg0: i32, %arg1: i32, %arg2: i32, %arg3: i32) -> (i32, i32, i32, i32) {
    %c0_i32 = arith.constant 0 : i32
    %c0_i32_0 = arith.constant 0 : i32
    return %arg0, %arg1, %arg2, %c0_i32 : i32, i32, i32, i32
  }
}

module attributes {stable_mosaic.version = 11 : i64} {
  func.func @_linear_kernel(%arg0: i32, %arg1: i32, %arg2: i32, %arg3: memref<16x32xbf16, #tpu.memory_space<vmem>>, %arg4: memref<32x32xbf16, #tpu.memory_space<vmem>>, %arg5: memref<1x32xbf16, #tpu.memory_space<vmem>>, %arg6: memref<16x32xf32, #tpu.memory_space<vmem>>, %arg7: memref<16x32xf32, #tpu.memory_space<vmem>>) attributes {dimension_semantics = [#tpu.dimension_semantics<parallel>, #tpu.dimension_semantics<parallel>, #tpu.dimension_semantics<arbitrary>], iteration_bounds = array<i64: 1, 1, 1>, scalar_prefetch = 0 : i64, scratch_operands = 1 : i64, tpu.core_type = #tpu.core_type<tc>, window_params = [{transform_indices = @transform_0, window_bounds = array<i64: 16, 32>}, {transform_indices = @transform_1, window_bounds = array<i64: 32, 32>}, {transform_indices = @transform_2, window_bounds = array<i64: 1, 32>}, {transform_indices = @transform_3, window_bounds = array<i64: 16, 32>}]} {
    %c0_i32 = arith.constant 0 : i32
    %0 = arith.cmpi eq, %arg2, %c0_i32 : i32
    %1 = arith.extui %0 : i1 to i32
    %c0_i32_0 = arith.constant 0 : i32
    %2 = arith.cmpi ne, %1, %c0_i32_0 : i32
    scf.if %2 {
      %cst_10 = arith.constant 0.000000e+00 : f32
      %12 = vector.broadcast %cst_10 : f32 to vector<16x32xf32>
      %c0_11 = arith.constant 0 : index
      %c0_12 = arith.constant 0 : index
      %13 = vector.load %arg7[%c0_11, %c0_12] : memref<16x32xf32, #tpu.memory_space<vmem>>, vector<16x32xf32>
      tpu.vector_store %arg7[%c0_11, %c0_12], %12 {strides = array<i32>} : memref<16x32xf32, #tpu.memory_space<vmem>>, vector<16x32xf32>,
    } else {
    }
    %c0 = arith.constant 0 : index
    %c0_1 = arith.constant 0 : index
    %3 = vector.load %arg7[%c0, %c0_1] : memref<16x32xf32, #tpu.memory_space<vmem>>, vector<16x32xf32>
    %c0_2 = arith.constant 0 : index
    %c0_3 = arith.constant 0 : index
    %4 = vector.load %arg3[%c0_2, %c0_3] : memref<16x32xbf16, #tpu.memory_space<vmem>>, vector<16x32xbf16>
    %c0_4 = arith.constant 0 : index
    %c0_5 = arith.constant 0 : index
    %5 = vector.load %arg4[%c0_4, %c0_5] : memref<32x32xbf16, #tpu.memory_space<vmem>>, vector<32x32xbf16>
    %cst = arith.constant dense<0.000000e+00> : vector<16x32xf32>
    %6 = tpu.matmul %4, %5, %cst {dimension_numbers = #tpu.dot_dimension_numbers<[1], [0], [0], [1], [0, 0, 1, 1], [], []>} : vector<16x32xbf16>, vector<32x32xbf16>, vector<16x32xf32> -> vector<16x32xf32>
    %7 = arith.addf %3, %6 : vector<16x32xf32>
    %c0_6 = arith.constant 0 : index
    %c0_7 = arith.constant 0 : index
    %8 = vector.load %arg7[%c0_6, %c0_7] : memref<16x32xf32, #tpu.memory_space<vmem>>, vector<16x32xf32>
    tpu.vector_store %arg7[%c0_6, %c0_7], %7 {strides = array<i32>} : memref<16x32xf32, #tpu.memory_space<vmem>>, vector<16x32xf32>,
    %c0_i32_8 = arith.constant 0 : i32
    %9 = arith.cmpi eq, %arg2, %c0_i32_8 : i32
    %10 = arith.extui %9 : i1 to i32
    %c0_i32_9 = arith.constant 0 : i32
    %11 = arith.cmpi ne, %10, %c0_i32_9 : i32
    scf.if %11 {
      %c0_10 = arith.constant 0 : index
      %c0_11 = arith.constant 0 : index
      %12 = vector.load %arg7[%c0_10, %c0_11] : memref<16x32xf32, #tpu.memory_space<vmem>>, vector<16x32xf32>
      %c0_12 = arith.constant 0 : index
      %c0_13 = arith.constant 0 : index
      %13 = vector.load %arg5[%c0_12, %c0_13] : memref<1x32xbf16, #tpu.memory_space<vmem>>, vector<1x32xbf16>
      %14 = arith.extf %13 : vector<1x32xbf16> to vector<1x32xf32>
      %15 = vector.broadcast %14 : vector<1x32xf32> to vector<16x32xf32>
      %16 = arith.addf %12, %15 : vector<16x32xf32>
      %c0_14 = arith.constant 0 : index
      %c0_15 = arith.constant 0 : index
      %17 = vector.load %arg6[%c0_14, %c0_15] : memref<16x32xf32, #tpu.memory_space<vmem>>, vector<16x32xf32>
      tpu.vector_store %arg6[%c0_14, %c0_15], %16 {strides = array<i32>} : memref<16x32xf32, #tpu.memory_space<vmem>>, vector<16x32xf32>,
    } else {
    }
    return
  }
  func.func @transform_0(%arg0: i32, %arg1: i32, %arg2: i32) -> (i32, i32) {
    %c0_i32 = arith.constant 0 : i32
    return %arg0, %arg2 : i32, i32
  }
  func.func @transform_1(%arg0: i32, %arg1: i32, %arg2: i32) -> (i32, i32) {
    %c0_i32 = arith.constant 0 : i32
    return %arg2, %arg1 : i32, i32
  }
  func.func @transform_2(%arg0: i32, %arg1: i32, %arg2: i32) -> (i32, i32) {
    %c0_i32 = arith.constant 0 : i32
    %c0_i32_0 = arith.constant 0 : i32
    return %c0_i32, %arg1 : i32, i32
  }
  func.func @transform_3(%arg0: i32, %arg1: i32, %arg2: i32) -> (i32, i32) {
    %c0_i32 = arith.constant 0 : i32
    return %arg0, %arg1 : i32, i32
  }
}

</mosaic_0001>

<llo_original>
// kernel: _mha_impl.9
$region0: #{_mha_impl.9}
  #allocation0 [shape = 'u32[]', space=smem, size = 0x4, offset = 0x4, fixed_abs, tag = 'smem constant byte address 0x4 - core index']
  #allocation1 [shape = 'u32[72,128]{1,0:T(1,128)}', space=vmem, size = 0x9000, scoped, tag = 'internal scratch']
  #allocation2 [shape = 'f32[16,32]{1,0:T(8,128)}', space=vmem, size = 0x2000, scoped, tag = 'scratch operand']
  %s0 = inlined_call_operand.vmem [shape: bf16[16,32], index: 0, kind: input, shape index: {}]
  %s1 = inlined_call_operand.vmem [shape: bf16[32,32], index: 1, kind: input, shape index: {}]
  %s2 = inlined_call_operand.vmem [shape: bf16[1,32], index: 2, kind: input, shape index: {}]
  %s3 = inlined_call_operand.hbm [shape: f32[16,32], index: 3, kind: output, shape index: {}]
  %s4 = sld [smem:[#allocation0]]
  $region30: #{_mha_impl.9} parent=0
    _
  %s6 = ssub.s32 1, %s4
  %s7 = scalar_select 0, %s6, %s4
  $region1: #{_mha_impl.9} parent=0
    #allocation3 [shape = 'u8[8192]{0}', space=vmem, size = 0x2000, scoped, tag = 'output window, operand 0, single buffered']
    #allocation4 [shape = 's32[1]{0}', space=sflag, size = 0x4, scoped, tag = 'scoped memory for _mha_impl.9']
    %8 = vsyncpa [#allocation4], 0
    // Predicated region
    $region2: #{_mha_impl.9} parent=1 // pred_check
      _
    $region3: #{_mha_impl.9} parent=1 // pred_check_branch
      %10 = sbr.rel (0) target = $region5
    $region4: #{_mha_impl.9} parent=1 // pred_region
      _
    $region5: #{_mha_impl.9} parent=1 // pred_fallthru
      _
    // Predicated region
    $region6: #{_mha_impl.9} parent=1 // pred_check
      _
    $region7: #{_mha_impl.9} parent=1 // pred_check_branch
      %12 = sbr.rel (0) target = $region9
    $region8: #{_mha_impl.9} parent=1 // pred_region
      _
    $region9: #{_mha_impl.9} parent=1 // pred_fallthru
      _
    // Predicated region
    $region10: #{_mha_impl.9} parent=1 // pred_check
      _
    $region11: #{_mha_impl.9} parent=1 // pred_check_branch
      %14 = sbr.rel (0) target = $region13
    $region12: #{_mha_impl.9} parent=1 // pred_region
      _
    $region13: #{_mha_impl.9} parent=1 // pred_fallthru
      _
    %p16 = scmp.eq.s32.totalorder 0, 0
    // Predicated region
    $region14: #{_mha_impl.9} parent=1 // pred_check
      %p17 = pneg %p16
    $region15: #{_mha_impl.9} parent=1 // pred_check_branch
      %19 = sbr.rel (%p17) target = $region17
    $region16: #{_mha_impl.9} parent=1 // pred_region
      %vm20 = vcmask 261120
      %21 = vst.msk [vmem:[#allocation2] sm:$0xff] %vm20, 0.0
      %22 = vst.msk [vmem:[#allocation2 + $0x8] sm:$0xff] %vm20, 0.0
    $region17: #{_mha_impl.9} parent=1 // pred_fallthru
      _
    %v23 = vld [vmem:[#allocation2] sm:$0xff]
    %v24 = vld [vmem:[#allocation2 + $0x8] sm:$0xff]
    %v25 = vld [vmem:[%s0] sm:$0xf]
    %v26 = vld [vmem:[%s0 + $0x4] sm:$0xf]
    %v27 = vld [vmem:[%s1] sm:$0xf]
    %v28 = vld [vmem:[%s1 + $0x4] sm:$0xf]
    %v29 = vld [vmem:[%s1 + $0x8] sm:$0xf]
    %v30 = vld [vmem:[%s1 + $0xc] sm:$0xf]
    %v33 = vunpack.c.l.b16 %v25
    %v34 = vunpack.c.l.b16 %v26
    %v35 = vpack.c.b16 %v34, %v33
    %v40 = vunpack.c.l.b16 %v27
    %v41 = vunpack.c.l.b16 %v28
    %v42 = vunpack.c.l.b16 %v29
    %v43 = vunpack.c.l.b16 %v30
    %v44 = vpack.c.b16 %v41, %v40
    %v45 = vpack.c.b16 %v43, %v42
    %vm48 = vcmask 261120
    %v50 = vsel %vm48, %v35, 0
    %52 = vmatpush.bf16.msra.mxu0 0
    %53 = vmatpush.bf16.msra.mxu0 0
    %54 = vmatpush.bf16.msra.mxu0 0
    %55 = vmatpush.bf16.msra.mxu0 0
    %56 = vmatpush.bf16.msra.mxu0 0
    %57 = vmatpush.bf16.msra.mxu0 0
    %58 = vmatpush.bf16.msra.mxu0 %v45
    %59 = vmatpush.bf16.msra.mxu0 %v44
    %60 = vmatmul.bf16.gmra.mxu0 %v50
    %v61 = vpop.f32.mrf.mxu0
    %v62 = vadd.f32 0.0, %v61
    %v63 = vpop.f32.mrf.mxu0
    %v64 = vadd.f32 0.0, %v63
    %65 = vdwg.mxu0
    %v66 = vadd.f32 %v23, %v62
    %v67 = vadd.f32 %v24, %v64
    %68 = vst.msk [vmem:[#allocation2] sm:$0xff] %vm48, %v66
    %69 = vst.msk [vmem:[#allocation2 + $0x8] sm:$0xff] %vm48, %v67
    // Predicated region
    $region18: #{_mha_impl.9} parent=1 // pred_check
      %p70 = pneg %p16
    $region19: #{_mha_impl.9} parent=1 // pred_check_branch
      %72 = sbr.rel (%p70) target = $region21
    $region20: #{_mha_impl.9} parent=1 // pred_region
      %v73 = vld [vmem:[#allocation2] sm:$0xff]
      %v74 = vld [vmem:[#allocation2 + $0x8] sm:$0xff]
      %v75 = vld [vmem:[%s2] sm:$0x1]
      %v76 = vunpack.c.l.bf16 %v75
      %v77 = vperm.slane %v76, 0
      %v78 = vadd.f32 %v73, %v77
      %v79 = vadd.f32 %v74, %v77
      %80 = vst.msk [vmem:[#allocation3] sm:$0xff] %vm48, %v78
      %81 = vst.msk [vmem:[#allocation3 + $0x8] sm:$0xff] %vm48, %v79
    $region21: #{_mha_impl.9} parent=1 // pred_fallthru
      _
    // Predicated region
    $region22: #{_mha_impl.9} parent=1 // pred_check
      _
    $region23: #{_mha_impl.9} parent=1 // pred_check_branch
      %83 = sbr.rel (0) target = $region25
    $region24: #{_mha_impl.9} parent=1 // pred_region
      %85 = vsyncadd [#allocation4], 0
      %s86 = sshll.u32 [#allocation3], 4
      %s87 = int_to_ptr.vmem [resolvable:$true] %s86
      %s88 = sshll.u32 %s3, 4
      %s89 = int_to_ptr.hbm [resolvable:$true] %s88
      %94 = dma.vmem_to_hbm [thread:$0]  %s87, 256, %s89, [#allocation4], 128, 128, 8
    $region25: #{_mha_impl.9} parent=1 // pred_fallthru
      _
    // Predicated region
    $region26: #{_mha_impl.9} parent=1 // pred_check
      _
    $region27: #{_mha_impl.9} parent=1 // pred_check_branch
      %96 = sbr.rel (0) target = $region29
    $region28: #{_mha_impl.9} parent=1 // pred_region
      %98 = dma.done [#allocation4], 256
    $region29: #{_mha_impl.9} parent=1 // pred_fallthru
      _
    %99 = vsyncpa [#allocation4], 1

// kernel: _mha_impl.5
$region0: #{_mha_impl.5}
  #allocation0 [shape = 'u32[]', space=smem, size = 0x4, offset = 0x4, fixed_abs, tag = 'smem constant byte address 0x4 - core index']
  #allocation1 [shape = 'u32[72,128]{1,0:T(1,128)}', space=vmem, size = 0x9000, scoped, tag = 'internal scratch']
  #allocation2 [shape = 'f32[16,32]{1,0:T(8,128)}', space=vmem, size = 0x2000, scoped, tag = 'scratch operand']
  %s0 = inlined_call_operand.vmem [shape: bf16[16,32], index: 0, kind: input, shape index: {}]
  %s1 = inlined_call_operand.vmem [shape: bf16[32,32], index: 1, kind: input, shape index: {}]
  %s2 = inlined_call_operand.vmem [shape: bf16[1,32], index: 2, kind: input, shape index: {}]
  %s3 = inlined_call_operand.vmem [shape: bf16[16,32], index: 3, kind: output, shape index: {}]
  %s4 = sld [smem:[#allocation0]]
  $region30: #{_mha_impl.5} parent=0
    _
  %s6 = ssub.s32 1, %s4
  %s7 = scalar_select 0, %s6, %s4
  // Predicated region
  $region2: #{_mha_impl.5} parent=0 // pred_check
    _
  $region3: #{_mha_impl.5} parent=0 // pred_check_branch
    %9 = sbr.rel (0) target = $region5
  $region4: #{_mha_impl.5} parent=0 // pred_region
    _
  $region5: #{_mha_impl.5} parent=0 // pred_fallthru
    _
  // Predicated region
  $region6: #{_mha_impl.5} parent=0 // pred_check
    _
  $region7: #{_mha_impl.5} parent=0 // pred_check_branch
    %11 = sbr.rel (0) target = $region9
  $region8: #{_mha_impl.5} parent=0 // pred_region
    _
  $region9: #{_mha_impl.5} parent=0 // pred_fallthru
    _
  // Predicated region
  $region10: #{_mha_impl.5} parent=0 // pred_check
    _
  $region11: #{_mha_impl.5} parent=0 // pred_check_branch
    %13 = sbr.rel (0) target = $region13
  $region12: #{_mha_impl.5} parent=0 // pred_region
    _
  $region13: #{_mha_impl.5} parent=0 // pred_fallthru
    _
  %p15 = scmp.eq.s32.totalorder 0, 0
  // Predicated region
  $region14: #{_mha_impl.5} parent=0 // pred_check
    %p16 = pneg %p15
  $region15: #{_mha_impl.5} parent=0 // pred_check_branch
    %18 = sbr.rel (%p16) target = $region17
  $region16: #{_mha_impl.5} parent=0 // pred_region
    %vm19 = vcmask 261120
    %20 = vst.msk [vmem:[#allocation2] sm:$0xff] %vm19, 0.0
    %21 = vst.msk [vmem:[#allocation2 + $0x8] sm:$0xff] %vm19, 0.0
  $region17: #{_mha_impl.5} parent=0 // pred_fallthru
    _
  %v22 = vld [vmem:[#allocation2] sm:$0xff]
  %v23 = vld [vmem:[#allocation2 + $0x8] sm:$0xff]
  %v24 = vld [vmem:[%s0] sm:$0xf]
  %v25 = vld [vmem:[%s0 + $0x4] sm:$0xf]
  %v26 = vld [vmem:[%s1] sm:$0xf]
  %v27 = vld [vmem:[%s1 + $0x4] sm:$0xf]
  %v28 = vld [vmem:[%s1 + $0x8] sm:$0xf]
  %v29 = vld [vmem:[%s1 + $0xc] sm:$0xf]
  %v32 = vunpack.c.l.b16 %v24
  %v33 = vunpack.c.l.b16 %v25
  %v34 = vpack.c.b16 %v33, %v32
  %v39 = vunpack.c.l.b16 %v26
  %v40 = vunpack.c.l.b16 %v27
  %v41 = vunpack.c.l.b16 %v28
  %v42 = vunpack.c.l.b16 %v29
  %v43 = vpack.c.b16 %v40, %v39
  %v44 = vpack.c.b16 %v42, %v41
  %vm47 = vcmask 261120
  %v49 = vsel %vm47, %v34, 0
  %51 = vmatpush.bf16.msra.mxu0 0
  %52 = vmatpush.bf16.msra.mxu0 0
  %53 = vmatpush.bf16.msra.mxu0 0
  %54 = vmatpush.bf16.msra.mxu0 0
  %55 = vmatpush.bf16.msra.mxu0 0
  %56 = vmatpush.bf16.msra.mxu0 0
  %57 = vmatpush.bf16.msra.mxu0 %v44
  %58 = vmatpush.bf16.msra.mxu0 %v43
  %59 = vmatmul.bf16.gmra.mxu0 %v49
  %v60 = vpop.f32.mrf.mxu0
  %v61 = vadd.f32 0.0, %v60
  %v62 = vpop.f32.mrf.mxu0
  %v63 = vadd.f32 0.0, %v62
  %64 = vdwg.mxu0
  %v65 = vadd.f32 %v22, %v61
  %v66 = vadd.f32 %v23, %v63
  %67 = vst.msk [vmem:[#allocation2] sm:$0xff] %vm47, %v65
  %68 = vst.msk [vmem:[#allocation2 + $0x8] sm:$0xff] %vm47, %v66
  // Predicated region
  $region18: #{_mha_impl.5} parent=0 // pred_check
    %p69 = pneg %p15
  $region19: #{_mha_impl.5} parent=0 // pred_check_branch
    %71 = sbr.rel (%p69) target = $region21
  $region20: #{_mha_impl.5} parent=0 // pred_region
    %v72 = vld [vmem:[#allocation2] sm:$0xff]
    %v73 = vld [vmem:[#allocation2 + $0x8] sm:$0xff]
    %v74 = vld [vmem:[%s2] sm:$0x1]
    %v75 = vunpack.c.l.bf16 %v74
    %v76 = vperm.slane %v75, 0
    %v77 = vadd.f32 %v72, %v76
    %v78 = vadd.f32 %v73, %v76
    %v79 = vpack.c.bf16 %v77, %v77
    %v80 = vpack.c.bf16 %v78, %v78
    %vm81 = vcmask 257024
    %82 = vst.msk [vmem:[%s3] sm:$0xf] %vm81, %v79
    %83 = vst.msk [vmem:[%s3 + $0x4] sm:$0xf] %vm81, %v80
  $region21: #{_mha_impl.5} parent=0 // pred_fallthru
    _
  // Predicated region
  $region22: #{_mha_impl.5} parent=0 // pred_check
    _
  $region23: #{_mha_impl.5} parent=0 // pred_check_branch
    %85 = sbr.rel (0) target = $region25
  $region24: #{_mha_impl.5} parent=0 // pred_region
    _
  $region25: #{_mha_impl.5} parent=0 // pred_fallthru
    _
  // Predicated region
  $region26: #{_mha_impl.5} parent=0 // pred_check
    _
  $region27: #{_mha_impl.5} parent=0 // pred_check_branch
    %87 = sbr.rel (0) target = $region29
  $region28: #{_mha_impl.5} parent=0 // pred_region
    _
  $region29: #{_mha_impl.5} parent=0 // pred_fallthru
    _

// kernel: _mha_impl.8
$region0: #{_mha_impl.8}
  #allocation0 [shape = 'u32[]', space=smem, size = 0x4, offset = 0x4, fixed_abs, tag = 'smem constant byte address 0x4 - core index']
  #allocation1 [shape = 'u32[72,128]{1,0:T(1,128)}', space=vmem, size = 0x9000, scoped, tag = 'internal scratch']
  #allocation2 [shape = 'f32[8,1]{1,0:T(8,128)}', space=vmem, size = 0x1000, scoped, tag = 'scratch operand']
  #allocation3 [shape = 'f32[8,1]{1,0:T(8,128)}', space=vmem, size = 0x1000, scoped, tag = 'scratch operand']
  #allocation4 [shape = 'f32[8,8]{1,0:T(8,128)}', space=vmem, size = 0x1000, scoped, tag = 'scratch operand']
  %s0 = inlined_call_operand.vmem [shape: bf16[2,4,8,8], index: 0, kind: input, shape index: {}]
  %s1 = inlined_call_operand.vmem [shape: bf16[2,4,8,8], index: 1, kind: input, shape index: {}]
  %s2 = inlined_call_operand.vmem [shape: bf16[2,4,8,8], index: 2, kind: input, shape index: {}]
  %s3 = inlined_call_operand.vmem [shape: bf16[2,4,8,8], index: 3, kind: output, shape index: {}]
  %s4 = sld [smem:[#allocation0]]
  $region53: #{_mha_impl.8} parent=0
    _
  %s6 = ssub.s32 1, %s4
  %s7 = scalar_select 0, %s6, %s4
  loop: start=0, step=1, limit=10
  $region2: #{_mha_impl.8} parent=0 // loop_pre_header
    _
  $region3: #{_mha_impl.8} parent=0 // loop_header
    %s9 = sphi 0, %s13
    %p10 = scmp.ge.s32.totalorder %s9, 10
    %s16 = sphi 0, %s42
    %s17 = sphi 0, %s38
    %s18 = sphi 0, %s34
    %s19 = sphi 0, %s30
    %s20 = sphi 0, %s16
    %s21 = sphi 0, %s17
    %s22 = sphi 0, %s18
    %s23 = sphi 0, %s19
    %s24 = sphi 0, %s20
    %s25 = sphi 0, %s21
    %s26 = sphi 0, %s22
    %s27 = sphi 0, %s23
    %s49 = sphi 0, %s51
    %s52 = sphi 0, %s49
    %s53 = sphi 0, %s52
    %s69 = sphi 0, %s53
    %s79 = sphi 0, %s81
    %s82 = sphi 0, %s79
    %s83 = sphi 0, %s82
    %s99 = sphi 0, %s83
    %s109 = sphi 0, %s111
    %s112 = sphi 0, %s109
    %s113 = sphi 0, %s112
    %s129 = sphi 0, %s113
    %s139 = sphi 0, %s141
    %s142 = sphi 0, %s139
    %s143 = sphi 0, %s142
    %s159 = sphi 0, %s143
  $region4: #{_mha_impl.8} parent=0 // loop_header_branch
    %12 = sbr.rel (%p10) target = $region8
  $region5: #{_mha_impl.8} parent=0 // loop_body
    %s14 = ssub.s32 %s9, 1
    %s15 = ssub.s32 %s9, 2
    %s28 = sadd.s32 1, %s19
    %p29 = scmp.ge.s32.totalorder %s28, 1
    %s30 = scalar_select %p29, 0, %s28
    %s31 = sadd.s32 1, %s18
    %s32 = scalar_select %p29, %s31, %s18
    %p33 = scmp.ge.s32.totalorder %s32, 1
    %s34 = scalar_select %p33, 0, %s32
    %s35 = sadd.s32 1, %s17
    %s36 = scalar_select %p33, %s35, %s17
    %p37 = scmp.ge.s32.totalorder %s36, 4
    %s38 = scalar_select %p37, 0, %s36
    %s39 = sadd.s32 1, %s16
    %s40 = scalar_select %p37, %s39, %s16
    %p41 = scmp.ge.s32.totalorder %s40, 2
    %s42 = scalar_select %p41, 0, %s40
    %s43 = ssub.s32 %s16, %s42
    %s44 = ssub.s32 %s17, %s38
    %s45 = sor.u32 %s43, %s44
    %s46 = ssub.s32 %s18, %s34
    %s47 = sor.u32 %s45, %s46
    %p48 = scmp.eq.s32.totalorder %s47, 0
    %s50 = sadd.s32 %s49, 1
    %s51 = scalar_select %p48, %s49, %s50
    %p54 = pneg %p48
    %p55 = scmp.eq.s32.totalorder %s9, 7
    %p56 = por %p54, %p55
    %p57 = scmp.ne.s32.totalorder %s49, %s52
    %p58 = scmp.eq.s32.totalorder %s9, 0
    %p59 = por %p57, %p58
    %p60 = scmp.ne.s32.totalorder %s49, %s52
    %p61 = scmp.eq.s32.totalorder %s14, 7
    %p62 = por %p60, %p61
    %p63 = scmp.ne.s32.totalorder %s52, %s53
    %p64 = scmp.eq.s32.totalorder %s14, 0
    %p65 = por %p63, %p64
    %p66 = scmp.ne.s32.totalorder %s52, %s53
    %p67 = scmp.eq.s32.totalorder %s15, 7
    %p68 = por %p66, %p67
    %p70 = scmp.ne.s32.totalorder %s53, %s69
    %p71 = scmp.eq.s32.totalorder %s15, 0
    %p72 = por %p70, %p71
    %s73 = ssub.s32 %s16, %s42
    %s74 = ssub.s32 %s17, %s38
    %s75 = sor.u32 %s73, %s74
    %s76 = ssub.s32 %s19, %s30
    %s77 = sor.u32 %s75, %s76
    %p78 = scmp.eq.s32.totalorder %s77, 0
    %s80 = sadd.s32 %s79, 1
    %s81 = scalar_select %p78, %s79, %s80
    %p84 = pneg %p78
    %p85 = scmp.eq.s32.totalorder %s9, 7
    %p86 = por %p84, %p85
    %p87 = scmp.ne.s32.totalorder %s79, %s82
    %p88 = scmp.eq.s32.totalorder %s9, 0
    %p89 = por %p87, %p88
    %p90 = scmp.ne.s32.totalorder %s79, %s82
    %p91 = scmp.eq.s32.totalorder %s14, 7
    %p92 = por %p90, %p91
    %p93 = scmp.ne.s32.totalorder %s82, %s83
    %p94 = scmp.eq.s32.totalorder %s14, 0
    %p95 = por %p93, %p94
    %p96 = scmp.ne.s32.totalorder %s82, %s83
    %p97 = scmp.eq.s32.totalorder %s15, 7
    %p98 = por %p96, %p97
    %p100 = scmp.ne.s32.totalorder %s83, %s99
    %p101 = scmp.eq.s32.totalorder %s15, 0
    %p102 = por %p100, %p101
    %s103 = ssub.s32 %s16, %s42
    %s104 = ssub.s32 %s17, %s38
    %s105 = sor.u32 %s103, %s104
    %s106 = ssub.s32 %s19, %s30
    %s107 = sor.u32 %s105, %s106
    %p108 = scmp.eq.s32.totalorder %s107, 0
    %s110 = sadd.s32 %s109, 1
    %s111 = scalar_select %p108, %s109, %s110
    %p114 = pneg %p108
    %p115 = scmp.eq.s32.totalorder %s9, 7
    %p116 = por %p114, %p115
    %p117 = scmp.ne.s32.totalorder %s109, %s112
    %p118 = scmp.eq.s32.totalorder %s9, 0
    %p119 = por %p117, %p118
    %p120 = scmp.ne.s32.totalorder %s109, %s112
    %p121 = scmp.eq.s32.totalorder %s14, 7
    %p122 = por %p120, %p121
    %p123 = scmp.ne.s32.totalorder %s112, %s113
    %p124 = scmp.eq.s32.totalorder %s14, 0
    %p125 = por %p123, %p124
    %p126 = scmp.ne.s32.totalorder %s112, %s113
    %p127 = scmp.eq.s32.totalorder %s15, 7
    %p128 = por %p126, %p127
    %p130 = scmp.ne.s32.totalorder %s113, %s129
    %p131 = scmp.eq.s32.totalorder %s15, 0
    %p132 = por %p130, %p131
    %s133 = ssub.s32 %s16, %s42
    %s134 = ssub.s32 %s17, %s38
    %s135 = sor.u32 %s133, %s134
    %s136 = ssub.s32 %s18, %s34
    %s137 = sor.u32 %s135, %s136
    %p138 = scmp.eq.s32.totalorder %s137, 0
    %s140 = sadd.s32 %s139, 1
    %s141 = scalar_select %p138, %s139, %s140
    %p144 = pneg %p138
    %p145 = scmp.eq.s32.totalorder %s9, 7
    %p146 = por %p144, %p145
    %p147 = scmp.ne.s32.totalorder %s139, %s142
    %p148 = scmp.eq.s32.totalorder %s9, 0
    %p149 = por %p147, %p148
    %p150 = scmp.ne.s32.totalorder %s139, %s142
    %p151 = scmp.eq.s32.totalorder %s14, 7
    %p152 = por %p150, %p151
    %p153 = scmp.ne.s32.totalorder %s142, %s143
    %p154 = scmp.eq.s32.totalorder %s14, 0
    %p155 = por %p153, %p154
    %p156 = scmp.ne.s32.totalorder %s142, %s143
    %p157 = scmp.eq.s32.totalorder %s15, 7
    %p158 = por %p156, %p157
    %p160 = scmp.ne.s32.totalorder %s143, %s159
    %p161 = scmp.eq.s32.totalorder %s15, 0
    %p162 = por %p160, %p161
    %p163 = scmp.le.s32.totalorder 1, %s9
    %p164 = scmp.lt.s32.totalorder %s9, 9
    %p165 = pnand %p163, %p164
    %p166 = pneg %p165
    // Predicated region
    $region9: #{_mha_impl.8} parent=5 // pred_check
      _
    $region10: #{_mha_impl.8} parent=5 // pred_check_branch
      %168 = sbr.rel (%p165) target = $region12
    $region11: #{_mha_impl.8} parent=5 // pred_region
      %s169 = ssub.s32 %s9, 1
    $region12: #{_mha_impl.8} parent=5 // pred_fallthru
      _
    %p170 = scmp.lt.s32.totalorder %s9, 8
    // Predicated region
    $region13: #{_mha_impl.8} parent=5 // pred_check
      %p171 = pneg %p170
    $region14: #{_mha_impl.8} parent=5 // pred_check_branch
      %173 = sbr.rel (%p171) target = $region16
    $region15: #{_mha_impl.8} parent=5 // pred_region
      // Predicated region
      $region17: #{_mha_impl.8} parent=15 // pred_check
        %p174 = pneg %p59
      $region18: #{_mha_impl.8} parent=15 // pred_check_branch
        %176 = sbr.rel (%p174) target = $region20
      $region19: #{_mha_impl.8} parent=15 // pred_region
        %p177 = scmp.lt.s32.totalorder %s16, 1
        %s178 = scalar_select %p177, %s16, 1
        %p179 = scmp.lt.s32.totalorder %s17, 3
        %s180 = scalar_select %p179, %s17, 3
        %p181 = scmp.lt.s32.totalorder %s18, 0
        %s182 = scalar_select %p181, %s18, 0
        %s183 = sadd.s32 %s182, %s180
        %s184 = smul.addr %s178, 4
        %s185 = sadd.s32 %s183, %s184
        %s186 = smul.addr %s185, 4
        %s187 = scalar_lea.vmem %s0, %s186
      $region20: #{_mha_impl.8} parent=15 // pred_fallthru
        _
      // Predicated region
      $region21: #{_mha_impl.8} parent=15 // pred_check
        %p188 = pneg %p89
      $region22: #{_mha_impl.8} parent=15 // pred_check_branch
        %190 = sbr.rel (%p188) target = $region24
      $region23: #{_mha_impl.8} parent=15 // pred_region
        %p191 = scmp.lt.s32.totalorder %s16, 1
        %s192 = scalar_select %p191, %s16, 1
        %p193 = scmp.lt.s32.totalorder %s17, 3
        %s194 = scalar_select %p193, %s17, 3
        %p195 = scmp.lt.s32.totalorder %s19, 0
        %s196 = scalar_select %p195, %s19, 0
        %s197 = sadd.s32 %s196, %s194
        %s198 = smul.addr %s192, 4
        %s199 = sadd.s32 %s197, %s198
        %s200 = smul.addr %s199, 4
        %s201 = scalar_lea.vmem %s1, %s200
      $region24: #{_mha_impl.8} parent=15 // pred_fallthru
        _
      // Predicated region
      $region25: #{_mha_impl.8} parent=15 // pred_check
        %p202 = pneg %p119
      $region26: #{_mha_impl.8} parent=15 // pred_check_branch
        %204 = sbr.rel (%p202) target = $region28
      $region27: #{_mha_impl.8} parent=15 // pred_region
        %p205 = scmp.lt.s32.totalorder %s16, 1
        %s206 = scalar_select %p205, %s16, 1
        %p207 = scmp.lt.s32.totalorder %s17, 3
        %s208 = scalar_select %p207, %s17, 3
        %p209 = scmp.lt.s32.totalorder %s19, 0
        %s210 = scalar_select %p209, %s19, 0
        %s211 = sadd.s32 %s210, %s208
        %s212 = smul.addr %s206, 4
        %s213 = sadd.s32 %s211, %s212
        %s214 = smul.addr %s213, 4
        %s215 = scalar_lea.vmem %s2, %s214
      $region28: #{_mha_impl.8} parent=15 // pred_fallthru
        _
    $region16: #{_mha_impl.8} parent=5 // pred_fallthru
      _
    %p216 = scmp.le.s32.totalorder 1, %s9
    %p217 = scmp.lt.s32.totalorder %s9, 9
    %p218 = pnand %p216, %p217
    %p219 = pneg %p218
    // Predicated region
    $region29: #{_mha_impl.8} parent=5 // pred_check
      _
    $region30: #{_mha_impl.8} parent=5 // pred_check_branch
      %221 = sbr.rel (%p218) target = $region32
    $region31: #{_mha_impl.8} parent=5 // pred_region
      %s222 = ssub.s32 %s9, 1
      %p223 = scmp.lt.s32.totalorder %s20, 1
      %s224 = scalar_select %p223, %s20, 1
      %p225 = scmp.lt.s32.totalorder %s21, 3
      %s226 = scalar_select %p225, %s21, 3
      %p227 = scmp.lt.s32.totalorder %s22, 0
      %s228 = scalar_select %p227, %s22, 0
      %s229 = sadd.s32 %s228, %s226
      %s230 = smul.addr %s224, 4
      %s231 = sadd.s32 %s229, %s230
      %s232 = smul.addr %s231, 4
      %s233 = scalar_lea.vmem %s0, %s232
      %p234 = pneg %p65
      %p235 = pneg %p62
      %p236 = scmp.lt.s32.totalorder %s20, 1
      %s237 = scalar_select %p236, %s20, 1
      %p238 = scmp.lt.s32.totalorder %s21, 3
      %s239 = scalar_select %p238, %s21, 3
      %p240 = scmp.lt.s32.totalorder %s23, 0
      %s241 = scalar_select %p240, %s23, 0
      %s242 = sadd.s32 %s241, %s239
      %s243 = smul.addr %s237, 4
      %s244 = sadd.s32 %s242, %s243
      %s245 = smul.addr %s244, 4
      %s246 = scalar_lea.vmem %s1, %s245
      %p247 = pneg %p95
      %p248 = pneg %p92
      %p249 = scmp.lt.s32.totalorder %s20, 1
      %s250 = scalar_select %p249, %s20, 1
      %p251 = scmp.lt.s32.totalorder %s21, 3
      %s252 = scalar_select %p251, %s21, 3
      %p253 = scmp.lt.s32.totalorder %s23, 0
      %s254 = scalar_select %p253, %s23, 0
      %s255 = sadd.s32 %s254, %s252
      %s256 = smul.addr %s250, 4
      %s257 = sadd.s32 %s255, %s256
      %s258 = smul.addr %s257, 4
      %s259 = scalar_lea.vmem %s2, %s258
      %p260 = pneg %p125
      %p261 = pneg %p122
      %p262 = pneg %p155
      %p263 = pneg %p152
      %p264 = scmp.lt.s32.totalorder %s20, 1
      %s265 = scalar_select %p264, %s20, 1
      %p266 = scmp.lt.s32.totalorder %s21, 3
      %s267 = scalar_select %p266, %s21, 3
      %p268 = scmp.lt.s32.totalorder %s22, 0
      %s269 = scalar_select %p268, %s22, 0
      %s270 = sadd.s32 %s269, %s267
      %s271 = smul.addr %s265, 4
      %s272 = sadd.s32 %s270, %s271
      %s273 = smul.addr %s272, 4
      %s274 = scalar_lea.vmem %s3, %s273
      %p275 = scmp.lt.s32.totalorder %s20, 1
      %s276 = scalar_select %p275, %s20, 1
      %p277 = scmp.lt.s32.totalorder %s21, 3
      %s278 = scalar_select %p277, %s21, 3
      %p279 = scmp.lt.s32.totalorder %s22, 0
      %s280 = scalar_select %p279, %s22, 0
      %s281 = sadd.s32 %s280, %s278
      %s282 = smul.addr %s276, 4
      %s283 = sadd.s32 %s281, %s282
      %s284 = smul.addr %s283, 4
      %s285 = scalar_lea.vmem %s0, %s284
      %p286 = scmp.lt.s32.totalorder %s20, 1
      %s287 = scalar_select %p286, %s20, 1
      %p288 = scmp.lt.s32.totalorder %s21, 3
      %s289 = scalar_select %p288, %s21, 3
      %p290 = scmp.lt.s32.totalorder %s23, 0
      %s291 = scalar_select %p290, %s23, 0
      %s292 = sadd.s32 %s291, %s289
      %s293 = smul.addr %s287, 4
      %s294 = sadd.s32 %s292, %s293
      %s295 = smul.addr %s294, 4
      %s296 = scalar_lea.vmem %s1, %s295
      %p297 = scmp.lt.s32.totalorder %s20, 1
      %s298 = scalar_select %p297, %s20, 1
      %p299 = scmp.lt.s32.totalorder %s21, 3
      %s300 = scalar_select %p299, %s21, 3
      %p301 = scmp.lt.s32.totalorder %s23, 0
      %s302 = scalar_select %p301, %s23, 0
      %s303 = sadd.s32 %s302, %s300
      %s304 = smul.addr %s298, 4
      %s305 = sadd.s32 %s303, %s304
      %s306 = smul.addr %s305, 4
      %s307 = scalar_lea.vmem %s2, %s306
      %p308 = scmp.lt.s32.totalorder %s20, 1
      %s309 = scalar_select %p308, %s20, 1
      %p310 = scmp.lt.s32.totalorder %s21, 3
      %s311 = scalar_select %p310, %s21, 3
      %p312 = scmp.lt.s32.totalorder %s22, 0
      %s313 = scalar_select %p312, %s22, 0
      %s314 = sadd.s32 %s313, %s311
      %s315 = smul.addr %s309, 4
      %s316 = sadd.s32 %s314, %s315
      %s317 = smul.addr %s316, 4
      %s318 = scalar_lea.vmem %s3, %s317
      %p320 = scmp.eq.s32.totalorder %s23, 0
      // Predicated region
      $region33: #{_mha_impl.8} parent=31 // pred_check
        %p321 = pneg %p320
      $region34: #{_mha_impl.8} parent=31 // pred_check_branch
        %323 = sbr.rel (%p321) target = $region36
      $region35: #{_mha_impl.8} parent=31 // pred_region
        %vm324 = vcmask 7168
        %325 = vst.msk [vmem:[#allocation2] sm:$0xff] %vm324, -inf
        %326 = vst.msk [vmem:[#allocation3] sm:$0xff] %vm324, 0.0
        %vm327 = vcmask 64512
        %328 = vst.msk [vmem:[#allocation4] sm:$0xff] %vm327, 0.0
      $region36: #{_mha_impl.8} parent=31 // pred_fallthru
        _
      %v329 = vld [vmem:[%s285] sm:$0xf]
      %v330 = vld [vmem:[%s296] sm:$0xf]
      %v331 = vld [vmem:[%s307] sm:$0xf]
      %vm332 = vcmask 64512
      %v334 = vsel %vm332, %v329, 0
      %v337 = vsel %vm332, %v330, 0
      %339 = vmatpush.bf16.xpose.msra.mxu0 0
      %340 = vmatpush.bf16.xpose.msra.mxu0 0
      %341 = vmatpush.bf16.xpose.msra.mxu0 0
      %342 = vmatpush.bf16.xpose.msra.mxu0 0
      %343 = vmatpush.bf16.xpose.msra.mxu0 0
      %344 = vmatpush.bf16.xpose.msra.mxu0 0
      %345 = vmatpush.bf16.xpose.msra.mxu0 0
      %346 = vmatpush.bf16.xpose.msra.mxu0 %v337
      %347 = vmatmul.bf16.gmra.mxu0 %v334
      %v348 = vpop.f32.mrf.mxu0
      %v349 = vadd.f32 0.0, %v348
      %v350 = vpop.f32.mrf.mxu0
      %351 = vdwg.mxu0
      %v352 = vld [vmem:[#allocation2] sm:$0xff]
      %v353 = vsel %vm332, %v349, -inf
      %354 = vmax.xlane.f32.xlu0 %v353
      %v355 = vpop.xlane.xlu0 %354
      %v356 = vmax.f32 %v352, %v355
      %v357 = vsub.f32 %v352, %v356
      %v358 = vmul.f32 %v357, 1.442695
      %v359 = vpow.pop %v358
      %361 = vset.pattern.permute.xlu0 0
      %362 = vperm.xlu0 %361, %v356
      %v363 = vpop.permute.xlu0 %362
      %v365 = vsub.f32 %v349, %v363
      %v366 = vmul.f32 %v365, 1.442695
      %v367 = vpow.pop %v366
      %v368 = vld [vmem:[#allocation3] sm:$0xff]
      %v369 = vmul.f32 %v359, %v368
      %v370 = vsel %vm332, %v367, 0.0
      %371 = vadd.xlane.f32.xlu0 %v370
      %v372 = vpop.xlane.xlu0 %371
      %v373 = vadd.f32 %v369, %v372
      %vm374 = vcmask 7168
      %375 = vst.msk [vmem:[#allocation3] sm:$0xff] %vm374, %v373
      %v376 = vld [vmem:[#allocation4] sm:$0xff]
      %378 = vset.pattern.permute.xlu0 0
      %379 = vperm.xlu0 %378, %v359
      %v380 = vpop.permute.xlu0 %379
      %v382 = vmul.f32 %v380, %v376
      %v383 = vpack.c.bf16 %v367, %v367
      %v385 = vsel %vm332, %v383, 0
      %vm387 = vcmask 1043456
      %v389 = vsel %vm387, %v331, 0
      %391 = vmatpush.bf16.msra.mxu0 0
      %392 = vmatpush.bf16.msra.mxu0 0
      %393 = vmatpush.bf16.msra.mxu0 0
      %394 = vmatpush.bf16.msra.mxu0 0
      %395 = vmatpush.bf16.msra.mxu0 0
      %396 = vmatpush.bf16.msra.mxu0 0
      %397 = vmatpush.bf16.msra.mxu0 0
      %398 = vmatpush.bf16.msra.mxu0 %v389
      %399 = vmatmul.bf16.gmra.mxu0 %v385
      %v400 = vpop.f32.mrf.mxu0
      %v401 = vadd.f32 0.0, %v400
      %v402 = vpop.f32.mrf.mxu0
      %403 = vdwg.mxu0
      %v404 = vadd.f32 %v382, %v401
      %405 = vst.msk [vmem:[#allocation4] sm:$0xff] %vm332, %v404
      %406 = vst.msk [vmem:[#allocation2] sm:$0xff] %vm374, %v356
      // Predicated region
      $region37: #{_mha_impl.8} parent=31 // pred_check
        %p407 = pneg %p320
      $region38: #{_mha_impl.8} parent=31 // pred_check_branch
        %409 = sbr.rel (%p407) target = $region40
      $region39: #{_mha_impl.8} parent=31 // pred_region
        %v410 = vld [vmem:[#allocation3] sm:$0xff]
        %v411 = vrcp.pop %v410
        %v412 = vld [vmem:[#allocation4] sm:$0xff]
        %414 = vset.pattern.permute.xlu0 0
        %415 = vperm.xlu0 %414, %v411
        %v416 = vpop.permute.xlu0 %415
        %v418 = vmul.f32 %v412, %v416
        %v419 = vpack.c.bf16 %v418, %v418
        %vm420 = vcmask 60416
        %421 = vst.msk [vmem:[%s318] sm:$0xf] %vm420, %v419
      $region40: #{_mha_impl.8} parent=31 // pred_fallthru
        _
      %p422 = scmp.lt.s32.totalorder %s20, 1
      %s423 = scalar_select %p422, %s20, 1
      %p424 = scmp.lt.s32.totalorder %s21, 3
      %s425 = scalar_select %p424, %s21, 3
      %p426 = scmp.lt.s32.totalorder %s22, 0
      %s427 = scalar_select %p426, %s22, 0
      %s428 = sadd.s32 %s427, %s425
      %s429 = smul.addr %s423, 4
      %s430 = sadd.s32 %s428, %s429
      %s431 = smul.addr %s430, 4
      %s432 = scalar_lea.vmem %s3, %s431
      // Predicated region
      $region41: #{_mha_impl.8} parent=31 // pred_check
        %p433 = pneg %p152
      $region42: #{_mha_impl.8} parent=31 // pred_check_branch
        %435 = sbr.rel (%p433) target = $region44
      $region43: #{_mha_impl.8} parent=31 // pred_region
        _
      $region44: #{_mha_impl.8} parent=31 // pred_fallthru
        _
    $region32: #{_mha_impl.8} parent=5 // pred_fallthru
      _
    %p436 = scmp.le.s32.totalorder 2, %s9
    // Predicated region
    $region45: #{_mha_impl.8} parent=5 // pred_check
      %p437 = pneg %p436
    $region46: #{_mha_impl.8} parent=5 // pred_check_branch
      %439 = sbr.rel (%p437) target = $region48
    $region47: #{_mha_impl.8} parent=5 // pred_region
      %s440 = ssub.s32 %s9, 2
      // Predicated region
      $region49: #{_mha_impl.8} parent=47 // pred_check
        %p441 = pneg %p158
      $region50: #{_mha_impl.8} parent=47 // pred_check_branch
        %443 = sbr.rel (%p441) target = $region52
      $region51: #{_mha_impl.8} parent=47 // pred_region
        %p444 = scmp.lt.s32.totalorder %s24, 1
        %s445 = scalar_select %p444, %s24, 1
        %p446 = scmp.lt.s32.totalorder %s25, 3
        %s447 = scalar_select %p446, %s25, 3
        %p448 = scmp.lt.s32.totalorder %s26, 0
        %s449 = scalar_select %p448, %s26, 0
        %s450 = sadd.s32 %s449, %s447
        %s451 = smul.addr %s445, 4
        %s452 = sadd.s32 %s450, %s451
        %s453 = smul.addr %s452, 4
        %s454 = scalar_lea.vmem %s3, %s453
      $region52: #{_mha_impl.8} parent=47 // pred_fallthru
        _
    $region48: #{_mha_impl.8} parent=5 // pred_fallthru
      _
  $region6: #{_mha_impl.8} parent=0 // loop_footer
    %s13 = sadd.s32 1, %s9
  $region7: #{_mha_impl.8} parent=0 // loop_footer_branch
    %8 = sbr.rel target = $region3
  $region8: #{_mha_impl.8} parent=0 // loop_exit
    _

</llo_original>
